<compile_context>
chip_gen: v6e
topology: v6e:2x2x1
jax: 0.10.0
libtpu: 0.0.40
codegen_flags: <defaults>
</compile_context>

<pallas_src>
import numpy as np
import jax
import jax.numpy as jnp
from jax import lax
from jax.experimental import pallas as pl
from jax.experimental.pallas import tpu as pltpu


# ----------------------------------------------------------------------------
# Schedule construction (plain numpy "__init__" glue, deterministic)
# ----------------------------------------------------------------------------
def cosine_beta_schedule_discrete(timesteps, s=0.008):
    """DiGress / Graph-DiT discrete cosine beta schedule. Returns (timesteps+1,)."""
    steps = timesteps + 2
    x = np.linspace(0, steps, steps)
    alphas_cumprod = np.cos(0.5 * np.pi * ((x / steps) + s) / (1 + s)) ** 2
    alphas_cumprod = alphas_cumprod / alphas_cumprod[0]
    alphas = alphas_cumprod[1:] / alphas_cumprod[:-1]
    betas = 1.0 - alphas
    return betas.squeeze().astype(np.float32)


# ----------------------------------------------------------------------------
# Pallas kernel: scalar SMEM gather  out[i] = betas[clamp(idx[i])]
# ----------------------------------------------------------------------------
def _make_gather_kernel(batch, n_betas, unroll):
    last = n_betas - 1

    def kernel(idx_ref, betas_ref, out_ref):
        # idx_ref:   SMEM (batch,)   int32   precomputed timestep indices
        # betas_ref: SMEM (n_betas,) float32 schedule table
        # out_ref:   SMEM (batch,)   float32 gathered betas
        def body(i, carry):
            j = idx_ref[i]
            # Clamp so a bad index can't OOB-read SMEM (deviation from torch,
            # which would fail on an out-of-range index).
            j = jnp.minimum(jnp.maximum(j, 0), last)
            out_ref[i] = betas_ref[j]
            return carry

        lax.fori_loop(0, batch, body, 0, unroll=unroll)

    return kernel


def _build_forward_fns(timesteps, batch):
    """Build (once per batch size) the jitted normalized-t and int-t paths."""
    n_betas = timesteps + 1
    unroll = batch <= 32  # short fixed trip-count -> give the scheduler visibility
    kernel = _make_gather_kernel(batch, n_betas, unroll)

    gather = pl.pallas_call(
        kernel,
        out_shape=jax.ShapeDtypeStruct((batch,), jnp.float32),
        in_specs=[
            pl.BlockSpec(memory_space=pltpu.MemorySpace.SMEM),
            pl.BlockSpec(memory_space=pltpu.MemorySpace.SMEM),
        ],
        out_specs=pl.BlockSpec(memory_space=pltpu.MemorySpace.SMEM),
    )

    @jax.jit
    def from_normalized(t_flat, betas):
        # round-half-to-even == torch.round; tiny elementwise op fused in the
        # same jit as the pallas_call (no extra HBM pad/slice round-trips).
        t_idx = jnp.round(t_flat.astype(jnp.float32) * float(timesteps)).astype(jnp.int32)
        return gather(t_idx, betas)

    @jax.jit
    def from_int(t_int_flat, betas):
        # torch's .long() truncates toward zero, as does astype(int32).
        return gather(t_int_flat.astype(jnp.int32), betas)

    return from_normalized, from_int


class PredefinedNoiseScheduleDiscrete:
    """JAX/Pallas port of the PyTorch module (forward path)."""

    def __init__(self, noise_schedule, timesteps):
        self.timesteps = timesteps
        if noise_schedule == "cosine":
            betas = cosine_beta_schedule_discrete(timesteps)
        else:
            # TODO(synk): other schedules ('custom', 'poly', 'linear', 'ddim',
            # 'sigmoid', 'expo', 'clipcosine', 'scaled_*') are pure numpy setup
            # glue; only 'cosine' is wired up for this synthetic kernel.
            raise NotImplementedError(noise_schedule)

        self.betas = jnp.asarray(betas, dtype=jnp.float32)           # (timesteps+1,)
        alphas = 1.0 - jnp.clip(self.betas, 0.0, 1.0)
        log_alpha_bar = jnp.cumsum(jnp.log(alphas), axis=0)
        self.alphas_bar = jnp.exp(log_alpha_bar)

        # One pair of compiled forwards per batch size; filled lazily.
        self._fwd_cache = {}

    def _get_fwd(self, batch):
        fns = self._fwd_cache.get(batch)
        if fns is None:
            fns = _build_forward_fns(self.timesteps, batch)
            self._fwd_cache[batch] = fns
        return fns

    def forward(self, t_normalized=None, t_int=None):
        assert int(t_normalized is None) + int(t_int is None) == 1
        if t_int is not None:
            t = jnp.asarray(t_int)
            flat = t.reshape(-1)
            _, from_int = self._get_fwd(flat.shape[0])
            out = from_int(flat, self.betas)
        else:
            t = jnp.asarray(t_normalized, dtype=jnp.float32)
            flat = t.reshape(-1)
            from_norm, _ = self._get_fwd(flat.shape[0])
            out = from_norm(flat, self.betas)
        return out.reshape(t.shape)

    __call__ = forward

    def get_alpha_bar(self, t_normalized=None, t_int=None):
        # Plain-JAX helper (not on the Pallas fast path).
        assert int(t_normalized is None) + int(t_int is None) == 1
        if t_int is None:
            t_int = jnp.round(jnp.asarray(t_normalized, jnp.float32) * self.timesteps)
        idx = jnp.clip(jnp.asarray(t_int).astype(jnp.int32), 0, self.timesteps)
        return self.alphas_bar[idx]


if __name__ == "__main__":
    timesteps = 16
    batch = 8

    sched = PredefinedNoiseScheduleDiscrete("cosine", timesteps)

    key = jax.random.PRNGKey(0)
    # t_normalized in [0, 1), shaped (B, 1) as the Graph-DiT forward uses.
    t_normalized = jax.random.uniform(key, (batch, 1), dtype=jnp.float32)

    out = jax.block_until_ready(sched.forward(t_normalized=t_normalized))

    # Reference (plain JAX) check: normalized path.
    t_idx_ref = jnp.round(t_normalized * timesteps).astype(jnp.int32).reshape(-1)
    ref = sched.betas[t_idx_ref].reshape(batch, 1)

    assert out.shape == (batch, 1)
    assert out.dtype == jnp.float32
    np.testing.assert_allclose(np.asarray(out), np.asarray(ref), rtol=1e-6, atol=1e-6)

    # Integer-timestep path check (no float round-trip).
    t_int = (jnp.arange(batch, dtype=jnp.int32) % (timesteps + 1)).reshape(batch, 1)
    out_int = jax.block_until_ready(sched.forward(t_int=t_int))
    ref_int = sched.betas[t_int.reshape(-1)].reshape(batch, 1)
    np.testing.assert_allclose(np.asarray(out_int), np.asarray(ref_int),
                               rtol=1e-6, atol=1e-6)

    print("KERNEL_OK")
</pallas_src>

<mosaic_0001>
module attributes {stable_mosaic.version = 11 : i64} {
  func.func @kernel(%arg0: memref<8xi32, #tpu.memory_space<smem>>, %arg1: memref<17xf32, #tpu.memory_space<smem>>, %arg2: memref<8xf32, #tpu.memory_space<smem>>) attributes {dimension_semantics = [], scalar_prefetch = 0 : i64, scratch_operands = 0 : i64, tpu.core_type = #tpu.core_type<tc>} {
    %c0_i32 = arith.constant 0 : i32
    %0 = arith.index_cast %c0_i32 : i32 to index
    %1 = memref.load %arg0[%0] : memref<8xi32, #tpu.memory_space<smem>>
    %c0_i32_0 = arith.constant 0 : i32
    %2 = arith.maxsi %1, %c0_i32_0 : i32
    %c16_i32 = arith.constant 16 : i32
    %3 = arith.minsi %2, %c16_i32 : i32
    %4 = arith.index_cast %3 : i32 to index
    %5 = memref.load %arg1[%4] : memref<17xf32, #tpu.memory_space<smem>>
    %6 = arith.index_cast %c0_i32 : i32 to index
    %7 = memref.load %arg2[%6] : memref<8xf32, #tpu.memory_space<smem>>
    memref.store %5, %arg2[%6] : memref<8xf32, #tpu.memory_space<smem>>
    %c1_i32 = arith.constant 1 : i32
    %8 = arith.index_cast %c1_i32 : i32 to index
    %9 = memref.load %arg0[%8] : memref<8xi32, #tpu.memory_space<smem>>
    %c0_i32_1 = arith.constant 0 : i32
    %10 = arith.maxsi %9, %c0_i32_1 : i32
    %c16_i32_2 = arith.constant 16 : i32
    %11 = arith.minsi %10, %c16_i32_2 : i32
    %12 = arith.index_cast %11 : i32 to index
    %13 = memref.load %arg1[%12] : memref<17xf32, #tpu.memory_space<smem>>
    %14 = arith.index_cast %c1_i32 : i32 to index
    %15 = memref.load %arg2[%14] : memref<8xf32, #tpu.memory_space<smem>>
    memref.store %13, %arg2[%14] : memref<8xf32, #tpu.memory_space<smem>>
    %c2_i32 = arith.constant 2 : i32
    %16 = arith.index_cast %c2_i32 : i32 to index
    %17 = memref.load %arg0[%16] : memref<8xi32, #tpu.memory_space<smem>>
    %c0_i32_3 = arith.constant 0 : i32
    %18 = arith.maxsi %17, %c0_i32_3 : i32
    %c16_i32_4 = arith.constant 16 : i32
    %19 = arith.minsi %18, %c16_i32_4 : i32
    %20 = arith.index_cast %19 : i32 to index
    %21 = memref.load %arg1[%20] : memref<17xf32, #tpu.memory_space<smem>>
    %22 = arith.index_cast %c2_i32 : i32 to index
    %23 = memref.load %arg2[%22] : memref<8xf32, #tpu.memory_space<smem>>
    memref.store %21, %arg2[%22] : memref<8xf32, #tpu.memory_space<smem>>
    %c3_i32 = arith.constant 3 : i32
    %24 = arith.index_cast %c3_i32 : i32 to index
    %25 = memref.load %arg0[%24] : memref<8xi32, #tpu.memory_space<smem>>
    %c0_i32_5 = arith.constant 0 : i32
    %26 = arith.maxsi %25, %c0_i32_5 : i32
    %c16_i32_6 = arith.constant 16 : i32
    %27 = arith.minsi %26, %c16_i32_6 : i32
    %28 = arith.index_cast %27 : i32 to index
    %29 = memref.load %arg1[%28] : memref<17xf32, #tpu.memory_space<smem>>
    %30 = arith.index_cast %c3_i32 : i32 to index
    %31 = memref.load %arg2[%30] : memref<8xf32, #tpu.memory_space<smem>>
    memref.store %29, %arg2[%30] : memref<8xf32, #tpu.memory_space<smem>>
    %c4_i32 = arith.constant 4 : i32
    %32 = arith.index_cast %c4_i32 : i32 to index
    %33 = memref.load %arg0[%32] : memref<8xi32, #tpu.memory_space<smem>>
    %c0_i32_7 = arith.constant 0 : i32
    %34 = arith.maxsi %33, %c0_i32_7 : i32
    %c16_i32_8 = arith.constant 16 : i32
    %35 = arith.minsi %34, %c16_i32_8 : i32
    %36 = arith.index_cast %35 : i32 to index
    %37 = memref.load %arg1[%36] : memref<17xf32, #tpu.memory_space<smem>>
    %38 = arith.index_cast %c4_i32 : i32 to index
    %39 = memref.load %arg2[%38] : memref<8xf32, #tpu.memory_space<smem>>
    memref.store %37, %arg2[%38] : memref<8xf32, #tpu.memory_space<smem>>
    %c5_i32 = arith.constant 5 : i32
    %40 = arith.index_cast %c5_i32 : i32 to index
    %41 = memref.load %arg0[%40] : memref<8xi32, #tpu.memory_space<smem>>
    %c0_i32_9 = arith.constant 0 : i32
    %42 = arith.maxsi %41, %c0_i32_9 : i32
    %c16_i32_10 = arith.constant 16 : i32
    %43 = arith.minsi %42, %c16_i32_10 : i32
    %44 = arith.index_cast %43 : i32 to index
    %45 = memref.load %arg1[%44] : memref<17xf32, #tpu.memory_space<smem>>
    %46 = arith.index_cast %c5_i32 : i32 to index
    %47 = memref.load %arg2[%46] : memref<8xf32, #tpu.memory_space<smem>>
    memref.store %45, %arg2[%46] : memref<8xf32, #tpu.memory_space<smem>>
    %c6_i32 = arith.constant 6 : i32
    %48 = arith.index_cast %c6_i32 : i32 to index
    %49 = memref.load %arg0[%48] : memref<8xi32, #tpu.memory_space<smem>>
    %c0_i32_11 = arith.constant 0 : i32
    %50 = arith.maxsi %49, %c0_i32_11 : i32
    %c16_i32_12 = arith.constant 16 : i32
    %51 = arith.minsi %50, %c16_i32_12 : i32
    %52 = arith.index_cast %51 : i32 to index
    %53 = memref.load %arg1[%52] : memref<17xf32, #tpu.memory_space<smem>>
    %54 = arith.index_cast %c6_i32 : i32 to index
    %55 = memref.load %arg2[%54] : memref<8xf32, #tpu.memory_space<smem>>
    memref.store %53, %arg2[%54] : memref<8xf32, #tpu.memory_space<smem>>
    %c7_i32 = arith.constant 7 : i32
    %56 = arith.index_cast %c7_i32 : i32 to index
    %57 = memref.load %arg0[%56] : memref<8xi32, #tpu.memory_space<smem>>
    %c0_i32_13 = arith.constant 0 : i32
    %58 = arith.maxsi %57, %c0_i32_13 : i32
    %c16_i32_14 = arith.constant 16 : i32
    %59 = arith.minsi %58, %c16_i32_14 : i32
    %60 = arith.index_cast %59 : i32 to index
    %61 = memref.load %arg1[%60] : memref<17xf32, #tpu.memory_space<smem>>
    %62 = arith.index_cast %c7_i32 : i32 to index
    %63 = memref.load %arg2[%62] : memref<8xf32, #tpu.memory_space<smem>>
    memref.store %61, %arg2[%62] : memref<8xf32, #tpu.memory_space<smem>>
    %c8_i32 = arith.constant 8 : i32
    return
  }
}

</mosaic_0001>

<llo_original>
// kernel: from_normalized.1
$region0: #{from_normalized.1}
  #allocation0 [shape = 'u32[]', space=smem, size = 0x4, offset = 0x4, fixed_abs, tag = 'smem constant byte address 0x4 - core index']
  #allocation1 [shape = 'u32[144,128]{1,0:T(1,128)}', space=vmem, size = 0x12000, scoped, tag = 'internal scratch']
  %s0 = inlined_call_operand.vmem [shape: s32[8], index: 0, kind: input, shape index: {}]
  %s1 = inlined_call_operand.vmem [shape: f32[17], index: 1, kind: input, shape index: {}]
  %s2 = inlined_call_operand.hbm [shape: f32[8], index: 2, kind: output, shape index: {}]
  %s3 = sld [smem:[#allocation0]]
  $region26: #{from_normalized.1} parent=0
    _
  %s5 = ssub.s32 1, %s3
  %s6 = scalar_select 0, %s5, %s3
  $region1: #{from_normalized.1} parent=0
    #allocation2 [shape = 'u8[512]{0}', space=smem, size = 0x200, scoped, tag = 'input window, operand 0, single buffered']
    #allocation3 [shape = 's32[1]{0}', space=sflag, size = 0x4, scoped, tag = 'scoped memory for from_normalized.1']
    #allocation4 [shape = 's32[1]{0}', space=sflag, size = 0x4, scoped, tag = 'scoped memory for from_normalized.1']
    #allocation5 [shape = 'u8[512]{0}', space=smem, size = 0x200, scoped, tag = 'input window, operand 1, single buffered']
    #allocation6 [shape = 's32[1]{0}', space=sflag, size = 0x4, scoped, tag = 'scoped memory for from_normalized.1']
    #allocation7 [shape = 'u8[512]{0}', space=smem, size = 0x200, scoped, tag = 'output window, operand 0, single buffered']
    %7 = vsyncpa [#allocation4], 0
    %8 = vsyncpa [#allocation6], 0
    %9 = vsyncpa [#allocation3], 0
    // Predicated region
    $region2: #{from_normalized.1} parent=1 // pred_check
      _
    $region3: #{from_normalized.1} parent=1 // pred_check_branch
      %11 = sbr.rel (0) target = $region5
    $region4: #{from_normalized.1} parent=1 // pred_region
      %s13 = ssub.s32 16, 16
      %14 = vsyncadd [#allocation4], %s13
      %s16 = sshll.u32 %s0, 4
      %s17 = int_to_ptr.vmem [resolvable:$true] %s16
      %19 = dma.vmem_to_smem %s17, 16, [#allocation2], [#allocation4]
    $region5: #{from_normalized.1} parent=1 // pred_fallthru
      _
    // Predicated region
    $region6: #{from_normalized.1} parent=1 // pred_check
      _
    $region7: #{from_normalized.1} parent=1 // pred_check_branch
      %21 = sbr.rel (0) target = $region9
    $region8: #{from_normalized.1} parent=1 // pred_region
      %s23 = ssub.s32 16, 16
      %24 = vsyncadd [#allocation6], %s23
      %s26 = sshll.u32 %s1, 4
      %s27 = int_to_ptr.vmem [resolvable:$true] %s26
      %29 = dma.vmem_to_smem %s27, 16, [#allocation5], [#allocation6]
    $region9: #{from_normalized.1} parent=1 // pred_fallthru
      _
    // Predicated region
    $region10: #{from_normalized.1} parent=1 // pred_check
      _
    $region11: #{from_normalized.1} parent=1 // pred_check_branch
      %31 = sbr.rel (0) target = $region13
    $region12: #{from_normalized.1} parent=1 // pred_region
      %32 = dma.done [#allocation4], 16
    $region13: #{from_normalized.1} parent=1 // pred_fallthru
      _
    // Predicated region
    $region14: #{from_normalized.1} parent=1 // pred_check
      _
    $region15: #{from_normalized.1} parent=1 // pred_check_branch
      %34 = sbr.rel (0) target = $region17
    $region16: #{from_normalized.1} parent=1 // pred_region
      %35 = dma.done [#allocation6], 16
    $region17: #{from_normalized.1} parent=1 // pred_fallthru
      _
    %36 = sfence
    %s37 = sld [smem:[#allocation2]]
    %p38 = scmp.gt.s32.totalorder %s37, 0
    %s39 = scalar_select %p38, %s37, 0
    %p40 = scmp.lt.s32.totalorder %s39, 16
    %s41 = scalar_select %p40, %s39, 16
    %s42 = sld [smem:[#allocation5 + %s41]]
    %s43 = scalar_lea.smem [#allocation7], 0
    %44 = sst [smem:[%s43]] %s42
    %s45 = sld [smem:[#allocation2 + $0x1]]
    %p46 = scmp.gt.s32.totalorder %s45, 0
    %s47 = scalar_select %p46, %s45, 0
    %p48 = scmp.lt.s32.totalorder %s47, 16
    %s49 = scalar_select %p48, %s47, 16
    %s50 = sld [smem:[#allocation5 + %s49]]
    %s51 = scalar_lea.smem [#allocation7], 1
    %52 = sst [smem:[%s51]] %s50
    %s53 = sld [smem:[#allocation2 + $0x2]]
    %p54 = scmp.gt.s32.totalorder %s53, 0
    %s55 = scalar_select %p54, %s53, 0
    %p56 = scmp.lt.s32.totalorder %s55, 16
    %s57 = scalar_select %p56, %s55, 16
    %s58 = sld [smem:[#allocation5 + %s57]]
    %s59 = scalar_lea.smem [#allocation7], 2
    %60 = sst [smem:[%s59]] %s58
    %s61 = sld [smem:[#allocation2 + $0x3]]
    %p62 = scmp.gt.s32.totalorder %s61, 0
    %s63 = scalar_select %p62, %s61, 0
    %p64 = scmp.lt.s32.totalorder %s63, 16
    %s65 = scalar_select %p64, %s63, 16
    %s66 = sld [smem:[#allocation5 + %s65]]
    %s67 = scalar_lea.smem [#allocation7], 3
    %68 = sst [smem:[%s67]] %s66
    %s69 = sld [smem:[#allocation2 + $0x4]]
    %p70 = scmp.gt.s32.totalorder %s69, 0
    %s71 = scalar_select %p70, %s69, 0
    %p72 = scmp.lt.s32.totalorder %s71, 16
    %s73 = scalar_select %p72, %s71, 16
    %s74 = sld [smem:[#allocation5 + %s73]]
    %s75 = scalar_lea.smem [#allocation7], 4
    %76 = sst [smem:[%s75]] %s74
    %s77 = sld [smem:[#allocation2 + $0x5]]
    %p78 = scmp.gt.s32.totalorder %s77, 0
    %s79 = scalar_select %p78, %s77, 0
    %p80 = scmp.lt.s32.totalorder %s79, 16
    %s81 = scalar_select %p80, %s79, 16
    %s82 = sld [smem:[#allocation5 + %s81]]
    %s83 = scalar_lea.smem [#allocation7], 5
    %84 = sst [smem:[%s83]] %s82
    %s85 = sld [smem:[#allocation2 + $0x6]]
    %p86 = scmp.gt.s32.totalorder %s85, 0
    %s87 = scalar_select %p86, %s85, 0
    %p88 = scmp.lt.s32.totalorder %s87, 16
    %s89 = scalar_select %p88, %s87, 16
    %s90 = sld [smem:[#allocation5 + %s89]]
    %s91 = scalar_lea.smem [#allocation7], 6
    %92 = sst [smem:[%s91]] %s90
    %s93 = sld [smem:[#allocation2 + $0x7]]
    %p94 = scmp.gt.s32.totalorder %s93, 0
    %s95 = scalar_select %p94, %s93, 0
    %p96 = scmp.lt.s32.totalorder %s95, 16
    %s97 = scalar_select %p96, %s95, 16
    %s98 = sld [smem:[#allocation5 + %s97]]
    %s99 = scalar_lea.smem [#allocation7], 7
    %100 = sst [smem:[%s99]] %s98
    // Predicated region
    $region18: #{from_normalized.1} parent=1 // pred_check
      _
    $region19: #{from_normalized.1} parent=1 // pred_check_branch
      %102 = sbr.rel (0) target = $region21
    $region20: #{from_normalized.1} parent=1 // pred_region
      %s104 = ssub.s32 16, 16
      %105 = vsyncadd [#allocation3], %s104
      %108 = dma.smem_to_hbm [#allocation7], 16, %s2, [#allocation3]
    $region21: #{from_normalized.1} parent=1 // pred_fallthru
      _
    // Predicated region
    $region22: #{from_normalized.1} parent=1 // pred_check
      _
    $region23: #{from_normalized.1} parent=1 // pred_check_branch
      %110 = sbr.rel (0) target = $region25
    $region24: #{from_normalized.1} parent=1 // pred_region
      %111 = dma.done [#allocation3], 16
    $region25: #{from_normalized.1} parent=1 // pred_fallthru
      _
    %112 = sfence
    %113 = vsyncpa [#allocation3], 1
    %114 = vsyncpa [#allocation4], 1
    %115 = vsyncpa [#allocation6], 1

</llo_original>
